<compile_context>
chip_gen: v7x
topology: tpu7x:2x2x1
jax: 0.10.0
libtpu: 0.0.40
codegen_flags: <defaults>
</compile_context>

<pallas_src>
import math

import jax
import jax.numpy as jnp
from jax.experimental import pallas as pl
from jax.experimental.pallas import tpu as pltpu


def spam_detector_kernel(x_ref, w_ref, b_ref, o_ref):
    # x_ref: (TB, F)  VMEM (f32 or bf16)
    # w_ref: (F, 1)   VMEM (same dtype as x)
    # b_ref: (1,)     f32 SMEM (scalar bias)
    # o_ref: (TB, 1)  f32 VMEM
    z = jnp.dot(x_ref[...], w_ref[...], preferred_element_type=jnp.float32)  # MXU matvec
    z = z + b_ref[0]                                                         # scalar bias from SMEM
    o_ref[...] = 1.0 / (1.0 + jnp.exp(-z))                                   # EUP exp + divide


def _choose_tile(B, F, itemsize, target_tile_bytes):
    """Pick a batch tile: ~target_tile_bytes per x buffer, >=2 grid steps for large B."""
    if B <= 1024:
        return B                                  # single tile; block == full array dims
    bytes_per_row = max(1, F * itemsize)
    tb = max(8, target_tile_bytes // bytes_per_row)
    tb = (tb // 128) * 128 if tb >= 128 else (tb // 8) * 8
    tb = min(tb, 32768)
    if tb >= B:
        # Ensure at least 2 "parallel" grid steps so v7x's 2 TensorCores both get work.
        tb = max(128, ((-(-B // 2)) + 127) // 128 * 128)
    return tb
    # TODO(synk): for extremely large F (> ~1M) a single 8-row tile exceeds the VMEM
    # budget; that regime would need a K-tiled reduction axis with an f32 accumulator.


def spam_detector_forward(x, weight, bias, *, tb=None, target_tile_bytes=4 << 20):
    """x: (B, F); weight: (1, F) (PyTorch nn.Linear layout); bias: (1,).

    Returns (B, 1) f32 spam probabilities == sigmoid(x @ weight.T + bias).
    """
    B, F = x.shape

    # Keep bf16 activations as-is (halves HBM traffic on a bandwidth-bound kernel);
    # everything else goes to f32.  Accumulation is f32 either way.
    if x.dtype != jnp.bfloat16:
        x = x.astype(jnp.float32)
    # (1, F) -> (F, 1) is a pure reshape of the native layout (no transpose cost).
    w = weight.reshape(F, 1).astype(x.dtype)
    b = bias.reshape(1).astype(jnp.float32)

    if tb is not None:
        TB = min(int(tb), B)
        if TB < B:
            TB = max(8, (TB // 8) * 8)            # (8,128) rule: sublane-aligned tile
    else:
        TB = _choose_tile(B, F, x.dtype.itemsize, target_tile_bytes)

    grid = (pl.cdiv(B, TB),)                      # partial last block handled by Pallas

    out = pl.pallas_call(
        spam_detector_kernel,
        out_shape=jax.ShapeDtypeStruct((B, 1), jnp.float32),
        grid_spec=pltpu.PrefetchScalarGridSpec(
            num_scalar_prefetch=0,
            grid=grid,
            in_specs=[
                pl.BlockSpec((TB, F), lambda i: (i, 0)),             # x tile (full feature rows)
                pl.BlockSpec((F, 1), lambda i: (0, 0)),              # weight (constant per step)
                pl.BlockSpec(memory_space=pltpu.MemorySpace.SMEM),   # bias scalar
            ],
            out_specs=pl.BlockSpec((TB, 1), lambda i: (i, 0)),
        ),
        compiler_params=pltpu.CompilerParams(
            dimension_semantics=("parallel",),    # shards batch steps across v7x's 2 TCs
            vmem_limit_bytes=32 << 20,            # headroom for the multi-MiB double-buffered tile
        ),
    )(x, w, b)

    return out


def xavier_uniform(key, shape):
    # nn.init.xavier_uniform_ for a (out_features, in_features) weight
    fan_out, fan_in = shape
    limit = math.sqrt(6.0 / (fan_in + fan_out))
    return jax.random.uniform(key, shape, dtype=jnp.float32, minval=-limit, maxval=limit)


if __name__ == "__main__":
    key = jax.random.PRNGKey(0)
    k_x, k_w, k_x2 = jax.random.split(key, 3)

    batch = 8
    input_size = 32

    x = jax.random.normal(k_x, (batch, input_size), dtype=jnp.float32)
    weight = xavier_uniform(k_w, (1, input_size))     # same layout as nn.Linear.weight
    bias = jnp.zeros((1,), dtype=jnp.float32)         # nn.init.zeros_

    out = spam_detector_forward(x, weight, bias)
    jax.block_until_ready(out)

    ref = jax.nn.sigmoid(x @ weight.T + bias)
    assert out.shape == (batch, 1)
    assert jnp.allclose(out, ref, atol=2e-3), "mismatch vs reference (small batch)"

    # Exercise the multi-tile path with a partial last block (grid of 3, last block = 44 rows).
    batch2 = 300
    x2 = jax.random.normal(k_x2, (batch2, input_size), dtype=jnp.float32)
    out2 = spam_detector_forward(x2, weight, bias, tb=128)
    jax.block_until_ready(out2)
    ref2 = jax.nn.sigmoid(x2 @ weight.T + bias)
    assert out2.shape == (batch2, 1)
    assert jnp.allclose(out2, ref2, atol=2e-3), "mismatch vs reference (tiled batch)"

    print("KERNEL_OK")
</pallas_src>

<mosaic_0001>
module attributes {stable_mosaic.version = 11 : i64} {
  func.func @spam_detector_kernel(%arg0: i32, %arg1: memref<8x32xf32, #tpu.memory_space<vmem>>, %arg2: memref<32x1xf32, #tpu.memory_space<vmem>>, %arg3: memref<1xf32, #tpu.memory_space<smem>>, %arg4: memref<8x1xf32, #tpu.memory_space<vmem>>) attributes {dimension_semantics = [#tpu.dimension_semantics<parallel>], iteration_bounds = array<i64: 1>, scalar_prefetch = 0 : i64, scratch_operands = 0 : i64, tpu.core_type = #tpu.core_type<tc>, window_params = [{transform_indices = @transform_0, window_bounds = array<i64: 8, 32>}, {pipeline_mode = #tpu.pipeline_mode<synchronous>, transform_indices = @transform_1, window_bounds = array<i64: 32, 1>}, {transform_indices = @transform_2, window_bounds = array<i64: 1>}, {transform_indices = @transform_3, window_bounds = array<i64: 8, 1>}]} {
    %c0 = arith.constant 0 : index
    %c0_0 = arith.constant 0 : index
    %0 = vector.load %arg1[%c0, %c0_0] : memref<8x32xf32, #tpu.memory_space<vmem>>, vector<8x32xf32>
    %c0_1 = arith.constant 0 : index
    %c0_2 = arith.constant 0 : index
    %1 = vector.load %arg2[%c0_1, %c0_2] : memref<32x1xf32, #tpu.memory_space<vmem>>, vector<32x1xf32>
    %cst = arith.constant dense<0.000000e+00> : vector<8x1xf32>
    %2 = tpu.matmul %0, %1, %cst {dimension_numbers = #tpu.dot_dimension_numbers<[1], [0], [0], [1], [0, 0, 1, 1], [], []>} : vector<8x32xf32>, vector<32x1xf32>, vector<8x1xf32> -> vector<8x1xf32>
    %c0_3 = arith.constant 0 : index
    %3 = memref.load %arg3[%c0_3] : memref<1xf32, #tpu.memory_space<smem>>
    %4 = vector.broadcast %3 : f32 to vector<8x1xf32>
    %5 = arith.addf %2, %4 : vector<8x1xf32>
    %cst_4 = arith.constant 0.000000e+00 : f32
    %6 = vector.broadcast %cst_4 : f32 to vector<8x1xf32>
    %7 = arith.subf %6, %5 : vector<8x1xf32>
    %8 = math.exp %7 : vector<8x1xf32>
    %cst_5 = arith.constant 1.000000e+00 : f32
    %9 = vector.broadcast %cst_5 : f32 to vector<8x1xf32>
    %10 = arith.addf %9, %8 : vector<8x1xf32>
    %cst_6 = arith.constant 1.000000e+00 : f32
    %11 = vector.broadcast %cst_6 : f32 to vector<8x1xf32>
    %12 = arith.divf %11, %10 : vector<8x1xf32>
    %c0_7 = arith.constant 0 : index
    %c0_8 = arith.constant 0 : index
    %13 = vector.load %arg4[%c0_7, %c0_8] : memref<8x1xf32, #tpu.memory_space<vmem>>, vector<8x1xf32>
    tpu.vector_store %arg4[%c0_7, %c0_8], %12 {strides = array<i32>} : memref<8x1xf32, #tpu.memory_space<vmem>>, vector<8x1xf32>,
    return
  }
  func.func @transform_0(%arg0: i32) -> (i32, i32) {
    %c0_i32 = arith.constant 0 : i32
    %c0_i32_0 = arith.constant 0 : i32
    return %arg0, %c0_i32 : i32, i32
  }
  func.func @transform_1(%arg0: i32) -> (i32, i32) {
    %c0_i32 = arith.constant 0 : i32
    %c0_i32_0 = arith.constant 0 : i32
    %c0_i32_1 = arith.constant 0 : i32
    return %c0_i32, %c0_i32_0 : i32, i32
  }
  func.func @transform_2(%arg0: i32) -> i32 {
    %c0_i32 = arith.constant 0 : i32
    %c0_i32_0 = arith.constant 0 : i32
    return %c0_i32 : i32
  }
  func.func @transform_3(%arg0: i32) -> (i32, i32) {
    %c0_i32 = arith.constant 0 : i32
    %c0_i32_0 = arith.constant 0 : i32
    return %arg0, %c0_i32 : i32, i32
  }
}

</mosaic_0001>

<llo_original>
// kernel: tpu_custom_call.1
$region0: #{tpu_custom_call.1}
  #allocation0 [shape = 'u32[]', space=smem, size = 0x4, offset = 0x4, fixed_abs, tag = 'smem constant byte address 0x4 - core index']
  #allocation1 [shape = 'u32[144,128]{1,0:T(1,128)}', space=vmem, size = 0x12000, scoped, tag = 'internal scratch']
  #allocation2 [shape = 'f32[1]{0:T(128)S(6)}', space=smem, size = 0x200, scoped, tag = 'scoped memory for tpu_custom_call.1']
  %s0 = inlined_call_operand.vmem [shape: f32[8,32], index: 0, kind: input, shape index: {}]
  %s1 = inlined_call_operand.vmem [shape: f32[32,1], index: 1, kind: input, shape index: {}]
  %s2 = inlined_call_operand.<no memory space> [shape: f32[1], index: 2, kind: input, shape index: {}]
  %s3 = inlined_call_operand.vmem [shape: f32[8,1], index: 3, kind: output, shape index: {}]
  %s4 = sld [smem:[#allocation0]]
  $region22: #{tpu_custom_call.1} parent=0
    _
  %s6 = ssub.s32 1, %s4
  %s7 = scalar_select 0, %s6, %s4
  %8 = sst [smem:[#allocation2]] %s2
  // Predicated region
  $region2: #{tpu_custom_call.1} parent=0 // pred_check
    _
  $region3: #{tpu_custom_call.1} parent=0 // pred_check_branch
    %10 = sbr.rel (0) target = $region5
  $region4: #{tpu_custom_call.1} parent=0 // pred_region
    _
  $region5: #{tpu_custom_call.1} parent=0 // pred_fallthru
    _
  // Predicated region
  $region6: #{tpu_custom_call.1} parent=0 // pred_check
    _
  $region7: #{tpu_custom_call.1} parent=0 // pred_check_branch
    %12 = sbr.rel (0) target = $region9
  $region8: #{tpu_custom_call.1} parent=0 // pred_region
    _
  $region9: #{tpu_custom_call.1} parent=0 // pred_fallthru
    _
  // Predicated region
  $region10: #{tpu_custom_call.1} parent=0 // pred_check
    _
  $region11: #{tpu_custom_call.1} parent=0 // pred_check_branch
    %14 = sbr.rel (0) target = $region13
  $region12: #{tpu_custom_call.1} parent=0 // pred_region
    _
  $region13: #{tpu_custom_call.1} parent=0 // pred_fallthru
    _
  %v15 = vld [vmem:[%s0] sm:$0xff]
  %v16 = vld [vmem:[%s1] sm:$0xff]
  %v17 = vld [vmem:[%s1 + $0x8] sm:$0xff]
  %v18 = vld [vmem:[%s1 + $0x10] sm:$0xff]
  %v19 = vld [vmem:[%s1 + $0x18] sm:$0xff]
  %s20 = sld [smem:[#allocation2]]
  %v21 = vstv %s20
  %vm22 = vcmask 261120
  %v24 = vsel %vm22, %v15, 0
  %26 = vmatprep.subr.mxu0 0.0
  %27 = vmatpush1.msra.mxu0 %v16
  %28 = vmatprep.subr.mxu0 0.0
  %29 = vmatpush1.msra.mxu0 %v17
  %30 = vmatprep.subr.mxu0 0.0
  %31 = vmatpush1.msra.mxu0 %v18
  %32 = vmatprep.subr.mxu0 0.0
  %33 = vmatpush1.msra.mxu0 %v19
  %34 = vmatprep.subr.mxu0 0.0
  %35 = vmatpush1.msra.mxu0 0.0
  %36 = vmatprep.subr.mxu0 0.0
  %37 = vmatpush1.msra.mxu0 0.0
  %38 = vmatprep.subr.mxu0 0.0
  %39 = vmatpush1.msra.mxu0 0.0
  %40 = vmatprep.subr.mxu0 0.0
  %41 = vmatpush1.msra.mxu0 0.0
  %42 = vmatprep.subr.mxu0 0.0
  %43 = vmatpush1.msra.mxu0 0.0
  %44 = vmatprep.subr.mxu0 0.0
  %45 = vmatpush1.msra.mxu0 0.0
  %46 = vmatprep.subr.mxu0 0.0
  %47 = vmatpush1.msra.mxu0 0.0
  %48 = vmatprep.subr.mxu0 0.0
  %49 = vmatpush1.msra.mxu0 0.0
  %50 = vmatprep.subr.mxu0 0.0
  %51 = vmatpush1.msra.mxu0 0.0
  %52 = vmatprep.subr.mxu0 0.0
  %53 = vmatpush1.msra.mxu0 0.0
  %54 = vmatprep.subr.mxu0 0.0
  %55 = vmatpush1.msra.mxu0 0.0
  %56 = vmatprep.subr.mxu0 0.0
  %57 = vmatpush1.msra.mxu0 0.0
  %58 = vmatprep.subr.mxu0 0.0
  %59 = vmatpush1.msra.mxu0 0.0
  %60 = vmatprep.subr.mxu0 0.0
  %61 = vmatpush1.msra.mxu0 0.0
  %62 = vmatprep.subr.mxu0 0.0
  %63 = vmatpush1.msra.mxu0 0.0
  %64 = vmatprep.subr.mxu0 0.0
  %65 = vmatpush1.msra.mxu0 0.0
  %66 = vmatprep.subr.mxu0 0.0
  %67 = vmatpush1.msra.mxu0 0.0
  %68 = vmatprep.subr.mxu0 0.0
  %69 = vmatpush1.msra.mxu0 0.0
  %70 = vmatprep.subr.mxu0 0.0
  %71 = vmatpush1.msra.mxu0 0.0
  %72 = vmatprep.subr.mxu0 0.0
  %73 = vmatpush1.msra.mxu0 0.0
  %74 = vmatprep.subr.mxu0 0.0
  %75 = vmatpush1.msra.mxu0 0.0
  %76 = vmatprep.subr.mxu0 0.0
  %77 = vmatpush1.msra.mxu0 0.0
  %78 = vmatprep.subr.mxu0 0.0
  %79 = vmatpush1.msra.mxu0 0.0
  %80 = vmatprep.subr.mxu0 0.0
  %81 = vmatpush1.msra.mxu0 0.0
  %82 = vmatprep.subr.mxu0 0.0
  %83 = vmatpush1.msra.mxu0 0.0
  %84 = vmatprep.subr.mxu0 0.0
  %85 = vmatpush1.msra.mxu0 0.0
  %86 = vmatprep.subr.mxu0 0.0
  %87 = vmatpush1.msra.mxu0 0.0
  %88 = vmatprep.subr.mxu0 0.0
  %89 = vmatpush1.msra.mxu0 0.0
  %90 = vmatprep.mubr.f32.mxu0 0.0
  %91 = vmatmul.mubr.f32.gmra.mrb[0].mxu0 %v24
  %v92 = vpop.f32.mrb[0].mxu0
  %v93 = vadd.f32 %v21, %v92
  %v94 = vpop.f32.mrb[0].mxu0
  %95 = vdwg.mxu0
  %v96 = vsub.f32 0.0, %v93
  %v97 = vmul.f32 %v96, 1.442695
  %v98 = vpow.pop %v97
  %v99 = vadd.f32 %v98, 1.0
  %v100 = vrcp.pop %v99
  %v101 = vmul.f32 1.0, %v100
  %vm102 = vcmask 7168
  %103 = vst.msk [vmem:[%s3] sm:$0xff] %vm102, %v101
  // Predicated region
  $region14: #{tpu_custom_call.1} parent=0 // pred_check
    _
  $region15: #{tpu_custom_call.1} parent=0 // pred_check_branch
    %105 = sbr.rel (0) target = $region17
  $region16: #{tpu_custom_call.1} parent=0 // pred_region
    _
  $region17: #{tpu_custom_call.1} parent=0 // pred_fallthru
    _
  // Predicated region
  $region18: #{tpu_custom_call.1} parent=0 // pred_check
    _
  $region19: #{tpu_custom_call.1} parent=0 // pred_check_branch
    %107 = sbr.rel (0) target = $region21
  $region20: #{tpu_custom_call.1} parent=0 // pred_region
    _
  $region21: #{tpu_custom_call.1} parent=0 // pred_fallthru
    _

</llo_original>
